<compile_context>
chip_gen: v5e
topology: v5e:2x2
jax: 0.10.0
libtpu: 0.0.40
codegen_flags: <defaults>
</compile_context>

<pallas_src>
import jax
import jax.numpy as jnp
from jax.experimental import pallas as pl
from jax.experimental.pallas import tpu as pltpu


def _round_up(v, m):
    return (v + m - 1) // m * m


def _chip_defaults():
    """Generation-aware defaults: VMEM budget, default row tile, megacore flag."""
    kind = ""
    try:
        kind = jax.devices()[0].device_kind.lower()
    except Exception:  # pragma: no cover - defensive
        pass
    if "v7" in kind:
        # v7x: 64 MiB physical VMEM per TensorCore -> keep headroom for compiler
        # scratch; ~310 FLOP/B roofline -> tm >= ~384; 2 TCs share the chip.
        return {"vmem_limit": 56 * 1024 * 1024, "tm": 512, "megacore": True}
    if "v6" in kind:
        # v6e: 128 MiB VMEM, ~650-700 FLOP per weight byte crossover -> big tm.
        return {"vmem_limit": 100 * 1024 * 1024, "tm": 768, "megacore": False}
    # v5e / unknown: 128 MiB VMEM, ~240 FLOP/B crossover (bf16).
    return {"vmem_limit": 96 * 1024 * 1024, "tm": 512, "megacore": False}


# ----------------------------- kernel bodies ------------------------------ #

def _ffn_kernel_resident(x_ref, w1_ref, b1_ref, w2_ref, b2_ref, o_ref):
    """Whole H resident (num_k == 1): one fused pass, no accumulator needed."""
    h = jnp.dot(x_ref[...], w1_ref[...], preferred_element_type=jnp.float32)
    h = h + b1_ref[...].astype(jnp.float32)
    # SiLU in f32: sigmoid goes to the EUP slot, multiply stays on the VPU.
    h = h * jax.nn.sigmoid(h)
    # TODO(synk): Dropout with p > 0 would need pltpu.prng_seed/prng_random_bits;
    # p = 0.0 here -> identity, elided.
    y = jnp.dot(h.astype(w2_ref.dtype), w2_ref[...],
                preferred_element_type=jnp.float32)
    o_ref[...] = (y + b2_ref[...].astype(jnp.float32)).astype(o_ref.dtype)


def _ffn_kernel_stream_f32out(x_ref, w1_ref, b1_ref, w2_ref, b2_ref, o_ref):
    """H streamed in chunks; float32 output block doubles as the accumulator."""
    k = pl.program_id(1)

    @pl.when(k == 0)
    def _init():
        o_ref[...] = jnp.zeros_like(o_ref)

    h = jnp.dot(x_ref[...], w1_ref[...], preferred_element_type=jnp.float32)
    h = h + b1_ref[...].astype(jnp.float32)
    h = h * jax.nn.sigmoid(h)
    o_ref[...] += jnp.dot(h.astype(w2_ref.dtype), w2_ref[...],
                          preferred_element_type=jnp.float32)

    @pl.when(k == pl.num_programs(1) - 1)
    def _finalize():
        o_ref[...] += b2_ref[...].astype(jnp.float32)


def _ffn_kernel_stream_scratch(x_ref, w1_ref, b1_ref, w2_ref, b2_ref, o_ref,
                               acc_ref):
    """H streamed in chunks; non-f32 output -> accumulate in f32 VMEM scratch."""
    k = pl.program_id(1)

    @pl.when(k == 0)
    def _init():
        acc_ref[...] = jnp.zeros_like(acc_ref)

    h = jnp.dot(x_ref[...], w1_ref[...], preferred_element_type=jnp.float32)
    h = h + b1_ref[...].astype(jnp.float32)
    h = h * jax.nn.sigmoid(h)
    acc_ref[...] += jnp.dot(h.astype(w2_ref.dtype), w2_ref[...],
                            preferred_element_type=jnp.float32)

    @pl.when(k == pl.num_programs(1) - 1)
    def _finalize():
        o_ref[...] = (acc_ref[...] + b2_ref[...].astype(jnp.float32)
                      ).astype(o_ref.dtype)


# ------------------------------- wrapper ----------------------------------- #

def feed_forward(x, w1, b1, w2, b2, *, tm=None, th=512,
                 vmem_limit_bytes=None, matmul_dtype=None):
    """Fused FeedForward: y = silu(x @ W1 + b1) @ W2 + b2  (dropout p=0 elided).

    x: (B, S, D).  w1: (D, H), b1: (H,), w2: (H, D), b2: (D,) — weights stored
    (in_features, out_features), the transpose of PyTorch's nn.Linear weight.
    `matmul_dtype=jnp.bfloat16` casts x/W1/W2 for the MXU (recommended for f32
    workloads on v5e); accumulation stays f32 and output keeps x's dtype.
    """
    B, S, D = x.shape
    H = w1.shape[1]
    M = B * S
    out_dtype = x.dtype

    cfg = _chip_defaults()
    if tm is None:
        tm = cfg["tm"]
    if vmem_limit_bytes is None:
        vmem_limit_bytes = cfg["vmem_limit"]

    if matmul_dtype is not None:
        x = x.astype(matmul_dtype)
        w1 = w1.astype(matmul_dtype)
        w2 = w2.astype(matmul_dtype)

    xb = jnp.dtype(x.dtype).itemsize
    wb = jnp.dtype(w1.dtype).itemsize
    ob = jnp.dtype(out_dtype).itemsize
    bb = jnp.dtype(b1.dtype).itemsize

    # ---- Row tile (primary knob: raises FLOP per weight byte when streaming).
    tm_eff = max(8, min(_round_up(tm, 8), _round_up(M, 8)))
    # v7x megacore: the row axis is the "parallel" axis -> make sure both
    # TensorCores get a row tile when M is large enough to be worth splitting.
    if cfg["megacore"] and M >= 256 and _round_up(M, tm_eff) // tm_eff == 1:
        tm_eff = _round_up((M + 1) // 2, 8)
    Mp = _round_up(M, tm_eff)
    n_row_tiles = Mp // tm_eff

    # ---- Lane-dense padded feature dims (multiples of 128 on minor dims).
    Dp = _round_up(D, 128)
    Hp = _round_up(H, 128)

    usable = int(vmem_limit_bytes * 0.85)  # headroom for compiler-internal scratch

    # Fixed footprint: double-buffered x / out tiles + single-buffered biases.
    fixed = 2 * tm_eff * Dp * xb + 2 * tm_eff * Dp * ob + Hp * bb + Dp * bb

    # Prefer whole-resident weights (num_k == 1): W1/W2 are loaded from HBM
    # exactly once per pallas_call and reused by every row tile.
    resident_bytes = fixed + (Dp * Hp + Hp * Dp) * wb
    if resident_bytes <= usable:
        th_eff = Hp
        num_k = 1
    else:
        # Stream H in chunks of th_eff; pad Hp to a multiple of th_eff so the
        # chunk never collapses to 128 (zero-padded H columns are exact).
        th_eff = max(128, min(_round_up(th, 128), Hp))
        needs_scratch = jnp.dtype(out_dtype) != jnp.dtype(jnp.float32)

        def _stream_bytes(tm_, th_):
            acc = tm_ * Dp * 4 if needs_scratch else 0
            return (2 * tm_ * Dp * xb + 2 * tm_ * Dp * ob + acc
                    + 2 * (Dp * th_ + th_ * Dp) * wb + 2 * th_ * bb + Dp * bb)

        # Shrink the hidden chunk first (tm is the intensity lever), tm last.
        while th_eff > 128 and _stream_bytes(tm_eff, th_eff) > usable:
            th_eff -= 128
        while tm_eff > 8 and _stream_bytes(tm_eff, th_eff) > usable:
            tm_eff = max(8, _round_up(tm_eff // 2, 8))
        Mp = _round_up(M, tm_eff)
        n_row_tiles = Mp // tm_eff
        Hp = _round_up(H, th_eff)
        num_k = Hp // th_eff

    # ---- Zero-pad only when needed (padding contributes exact zeros through
    # both matmuls and silu(0)=0; padded rows/cols are sliced off).
    # TODO(synk): in a real model, pre-pad W1/W2/b1/b2 once at init so the
    # per-call hot path never copies the weights.
    x2 = x.reshape(M, D)
    if Mp != M or Dp != D:
        x2 = jnp.pad(x2, ((0, Mp - M), (0, Dp - D)))
    w1p = w1 if (Dp == D and Hp == H) else jnp.pad(w1, ((0, Dp - D), (0, Hp - H)))
    w2p = w2 if (Dp == D and Hp == H) else jnp.pad(w2, ((0, Hp - H), (0, Dp - D)))
    b1p = (b1 if Hp == H else jnp.pad(b1, (0, Hp - H))).reshape(1, Hp)
    b2p = (b2 if Dp == D else jnp.pad(b2, (0, Dp - D))).reshape(1, Dp)

    def _spec(shape, index_map, constant):
        # Blocks whose block index never changes over the grid don't need
        # double-buffering -> halve their VMEM footprint.
        if constant:
            return pl.BlockSpec(shape, index_map, pipeline_mode=pl.Buffered(1))
        return pl.BlockSpec(shape, index_map)

    in_specs = [
        pl.BlockSpec((tm_eff, Dp), lambda i, k: (i, 0)),        # x rows
        _spec((Dp, th_eff), lambda i, k: (0, k), num_k == 1),   # W1 (chunk)
        _spec((1, th_eff), lambda i, k: (0, k), num_k == 1),    # b1 (chunk)
        _spec((th_eff, Dp), lambda i, k: (k, 0), num_k == 1),   # W2 (chunk)
        _spec((1, Dp), lambda i, k: (0, 0), True),              # b2 (constant)
    ]
    out_specs = pl.BlockSpec((tm_eff, Dp), lambda i, k: (i, 0))

    if num_k == 1:
        kernel = _ffn_kernel_resident
        scratch_shapes = []
    elif jnp.dtype(out_dtype) == jnp.dtype(jnp.float32):
        # Output block index is constant over k -> it is VMEM-resident across
        # the reduction; accumulate straight into it (no separate f32 scratch).
        kernel = _ffn_kernel_stream_f32out
        scratch_shapes = []
    else:
        kernel = _ffn_kernel_stream_scratch
        scratch_shapes = [pltpu.VMEM((tm_eff, Dp), jnp.float32)]

    cost = pl.CostEstimate(
        flops=4 * M * D * H,
        transcendentals=M * H,
        bytes_accessed=(M * D * xb + D * H * wb + H * D * wb
                        + H * bb + D * bb + M * D * ob),
    )

    out = pl.pallas_call(
        kernel,
        out_shape=jax.ShapeDtypeStruct((Mp, Dp), out_dtype),
        grid=(n_row_tiles, num_k),
        in_specs=in_specs,
        out_specs=out_specs,
        scratch_shapes=scratch_shapes,
        compiler_params=pltpu.CompilerParams(
            dimension_semantics=("parallel", "arbitrary"),
            vmem_limit_bytes=int(vmem_limit_bytes),
        ),
        cost_estimate=cost,
    )(x2, w1p, b1p, w2p, b2p)

    if Mp != M or Dp != D:
        out = out[:M, :D]
    return out.reshape(B, S, D)


def _reference(x, w1, b1, w2, b2):
    h = x @ w1 + b1
    h = h * jax.nn.sigmoid(h)
    return h @ w2 + b2


if __name__ == "__main__":
    # Small config consistent with FeedForward(dim, hidden_dim).
    B, S = 2, 8
    dim, hidden_dim = 32, 64

    key = jax.random.PRNGKey(0)
    kx, k1, kb1, k2, kb2 = jax.random.split(key, 5)

    x = jax.random.normal(kx, (B, S, dim), dtype=jnp.float32)

    # Deterministic parameter init (PyTorch nn.Linear-style uniform bounds),
    # stored as (in, out) so the kernel does x @ W directly.
    bound1 = 1.0 / (dim ** 0.5)
    w1 = jax.random.uniform(k1, (dim, hidden_dim), jnp.float32, -bound1, bound1)
    b1 = jax.random.uniform(kb1, (hidden_dim,), jnp.float32, -bound1, bound1)
    bound2 = 1.0 / (hidden_dim ** 0.5)
    w2 = jax.random.uniform(k2, (hidden_dim, dim), jnp.float32, -bound2, bound2)
    b2 = jax.random.uniform(kb2, (dim,), jnp.float32, -bound2, bound2)

    y = feed_forward(x, w1, b1, w2, b2)
    y = jax.block_until_ready(y)

    y_ref = _reference(x, w1, b1, w2, b2)
    assert y.shape == (B, S, dim)
    assert jnp.allclose(y, y_ref, atol=1e-4, rtol=1e-4), "mismatch vs reference"

    print("KERNEL_OK")
</pallas_src>

<mosaic_0001>
module attributes {stable_mosaic.version = 11 : i64} {
  func.func @_ffn_kernel_resident(%arg0: i32, %arg1: i32, %arg2: memref<16x128xf32, #tpu.memory_space<vmem>>, %arg3: memref<128x128xf32, #tpu.memory_space<vmem>>, %arg4: memref<1x128xf32, #tpu.memory_space<vmem>>, %arg5: memref<128x128xf32, #tpu.memory_space<vmem>>, %arg6: memref<1x128xf32, #tpu.memory_space<vmem>>, %arg7: memref<16x128xf32, #tpu.memory_space<vmem>>) attributes {dimension_semantics = [#tpu.dimension_semantics<parallel>, #tpu.dimension_semantics<arbitrary>], iteration_bounds = array<i64: 1, 1>, scalar_prefetch = 0 : i64, scratch_operands = 0 : i64, tpu.core_type = #tpu.core_type<tc>, window_params = [{transform_indices = @transform_0, window_bounds = array<i64: 16, 128>}, {pipeline_mode = #tpu.pipeline_mode<synchronous>, transform_indices = @transform_1, window_bounds = array<i64: 128, 128>}, {pipeline_mode = #tpu.pipeline_mode<synchronous>, transform_indices = @transform_2, window_bounds = array<i64: 1, 128>}, {pipeline_mode = #tpu.pipeline_mode<synchronous>, transform_indices = @transform_3, window_bounds = array<i64: 128, 128>}, {pipeline_mode = #tpu.pipeline_mode<synchronous>, transform_indices = @transform_4, window_bounds = array<i64: 1, 128>}, {transform_indices = @transform_5, window_bounds = array<i64: 16, 128>}]} {
    %c0 = arith.constant 0 : index
    %c0_0 = arith.constant 0 : index
    %0 = vector.load %arg2[%c0, %c0_0] : memref<16x128xf32, #tpu.memory_space<vmem>>, vector<16x128xf32>
    %c0_1 = arith.constant 0 : index
    %c0_2 = arith.constant 0 : index
    %1 = vector.load %arg3[%c0_1, %c0_2] : memref<128x128xf32, #tpu.memory_space<vmem>>, vector<128x128xf32>
    %cst = arith.constant dense<0.000000e+00> : vector<16x128xf32>
    %2 = tpu.matmul %0, %1, %cst {dimension_numbers = #tpu.dot_dimension_numbers<[1], [0], [0], [1], [0, 0, 1, 1], [], []>} : vector<16x128xf32>, vector<128x128xf32>, vector<16x128xf32> -> vector<16x128xf32>
    %c0_3 = arith.constant 0 : index
    %c0_4 = arith.constant 0 : index
    %3 = vector.load %arg4[%c0_3, %c0_4] : memref<1x128xf32, #tpu.memory_space<vmem>>, vector<1x128xf32>
    %4 = vector.broadcast %3 : vector<1x128xf32> to vector<16x128xf32>
    %5 = arith.addf %2, %4 : vector<16x128xf32>
    %6 = arith.negf %5 : vector<16x128xf32>
    %7 = math.exp %6 : vector<16x128xf32>
    %cst_5 = arith.constant 1.000000e+00 : f32
    %8 = vector.broadcast %cst_5 : f32 to vector<16x128xf32>
    %9 = arith.addf %8, %7 : vector<16x128xf32>
    %10 = arith.divf %8, %9 : vector<16x128xf32>
    %11 = arith.mulf %5, %10 : vector<16x128xf32>
    %c0_6 = arith.constant 0 : index
    %c0_7 = arith.constant 0 : index
    %12 = vector.load %arg5[%c0_6, %c0_7] : memref<128x128xf32, #tpu.memory_space<vmem>>, vector<128x128xf32>
    %cst_8 = arith.constant dense<0.000000e+00> : vector<16x128xf32>
    %13 = tpu.matmul %11, %12, %cst_8 {dimension_numbers = #tpu.dot_dimension_numbers<[1], [0], [0], [1], [0, 0, 1, 1], [], []>} : vector<16x128xf32>, vector<128x128xf32>, vector<16x128xf32> -> vector<16x128xf32>
    %c0_9 = arith.constant 0 : index
    %c0_10 = arith.constant 0 : index
    %14 = vector.load %arg6[%c0_9, %c0_10] : memref<1x128xf32, #tpu.memory_space<vmem>>, vector<1x128xf32>
    %15 = vector.broadcast %14 : vector<1x128xf32> to vector<16x128xf32>
    %16 = arith.addf %13, %15 : vector<16x128xf32>
    %c0_11 = arith.constant 0 : index
    %c0_12 = arith.constant 0 : index
    %17 = vector.load %arg7[%c0_11, %c0_12] : memref<16x128xf32, #tpu.memory_space<vmem>>, vector<16x128xf32>
    tpu.vector_store %arg7[%c0_11, %c0_12], %16 {strides = array<i32>} : memref<16x128xf32, #tpu.memory_space<vmem>>, vector<16x128xf32>,
    return
  }
  func.func @transform_0(%arg0: i32, %arg1: i32) -> (i32, i32) {
    %c0_i32 = arith.constant 0 : i32
    %c0_i32_0 = arith.constant 0 : i32
    return %arg0, %c0_i32 : i32, i32
  }
  func.func @transform_1(%arg0: i32, %arg1: i32) -> (i32, i32) {
    %c0_i32 = arith.constant 0 : i32
    %c0_i32_0 = arith.constant 0 : i32
    return %c0_i32, %arg1 : i32, i32
  }
  func.func @transform_2(%arg0: i32, %arg1: i32) -> (i32, i32) {
    %c0_i32 = arith.constant 0 : i32
    %c0_i32_0 = arith.constant 0 : i32
    return %c0_i32, %arg1 : i32, i32
  }
  func.func @transform_3(%arg0: i32, %arg1: i32) -> (i32, i32) {
    %c0_i32 = arith.constant 0 : i32
    %c0_i32_0 = arith.constant 0 : i32
    return %arg1, %c0_i32 : i32, i32
  }
  func.func @transform_4(%arg0: i32, %arg1: i32) -> (i32, i32) {
    %c0_i32 = arith.constant 0 : i32
    %c0_i32_0 = arith.constant 0 : i32
    %c0_i32_1 = arith.constant 0 : i32
    return %c0_i32, %c0_i32_0 : i32, i32
  }
  func.func @transform_5(%arg0: i32, %arg1: i32) -> (i32, i32) {
    %c0_i32 = arith.constant 0 : i32
    %c0_i32_0 = arith.constant 0 : i32
    return %arg0, %c0_i32 : i32, i32
  }
}

</mosaic_0001>

<llo_original>
// kernel: tpu_custom_call.1
$region0: #{tpu_custom_call.1}
  #allocation0 [shape = 'u32[]', space=smem, size = 0x4, offset = 0x4, fixed_abs, tag = 'smem constant byte address 0x4 - core index']
  #allocation1 [shape = 'u32[72,128]{1,0:T(1,128)}', space=vmem, size = 0x9000, scoped, tag = 'internal scratch']
  %s0 = inlined_call_operand.hbm [shape: f32[16,128], index: 0, kind: input, shape index: {}]
  %s1 = inlined_call_operand.hbm [shape: f32[128,128], index: 1, kind: input, shape index: {}]
  %s2 = inlined_call_operand.vmem [shape: f32[1,128], index: 2, kind: input, shape index: {}]
  %s3 = inlined_call_operand.hbm [shape: f32[128,128], index: 3, kind: input, shape index: {}]
  %s4 = inlined_call_operand.vmem [shape: f32[1,128], index: 4, kind: input, shape index: {}]
  %s5 = inlined_call_operand.hbm [shape: f32[16,128], index: 5, kind: output, shape index: {}]
  %s6 = sld [smem:[#allocation0]]
  $region42: #{tpu_custom_call.1} parent=0
    _
  %s8 = ssub.s32 1, %s6
  %s9 = scalar_select 0, %s8, %s6
  $region1: #{tpu_custom_call.1} parent=0
    #allocation2 [shape = 'u8[8192]{0}', space=vmem, size = 0x2000, scoped, tag = 'input window, operand 0, single buffered']
    #allocation3 [shape = 's32[1]{0}', space=sflag, size = 0x4, scoped, tag = 'scoped memory for tpu_custom_call.1']
    #allocation4 [shape = 's32[1]{0}', space=sflag, size = 0x4, scoped, tag = 'scoped memory for tpu_custom_call.1']
    #allocation5 [shape = 'u8[65536]{0}', space=vmem, size = 0x10000, scoped, tag = 'input window, operand 1, single buffered']
    #allocation6 [shape = 's32[1]{0}', space=sflag, size = 0x4, scoped, tag = 'scoped memory for tpu_custom_call.1']
    #allocation7 [shape = 'u8[65536]{0}', space=vmem, size = 0x10000, scoped, tag = 'input window, operand 3, single buffered']
    #allocation8 [shape = 'u8[8192]{0}', space=vmem, size = 0x2000, scoped, tag = 'output window, operand 0, single buffered']
    %10 = vsyncpa [#allocation3], 0
    %11 = vsyncpa [#allocation6], 0
    %12 = vsyncpa [#allocation4], 0
    // Predicated region
    $region2: #{tpu_custom_call.1} parent=1 // pred_check
      _
    $region3: #{tpu_custom_call.1} parent=1 // pred_check_branch
      %14 = sbr.rel (0) target = $region5
    $region4: #{tpu_custom_call.1} parent=1 // pred_region
      %16 = vsyncadd [#allocation3], 0
      %s17 = sshll.u32 %s0, 4
      %s18 = int_to_ptr.hbm [resolvable:$true] %s17
      %s19 = sshll.u32 [#allocation2], 4
      %s20 = int_to_ptr.vmem [resolvable:$true] %s19
      %25 = dma.hbm_to_vmem [thread:$0]  %s18, 256, %s20, [#allocation3], 128, 128, 8
    $region5: #{tpu_custom_call.1} parent=1 // pred_fallthru
      _
    // Predicated region
    $region6: #{tpu_custom_call.1} parent=1 // pred_check
      _
    $region7: #{tpu_custom_call.1} parent=1 // pred_check_branch
      %27 = sbr.rel (0) target = $region9
    $region8: #{tpu_custom_call.1} parent=1 // pred_region
      %29 = vsyncadd [#allocation6], 0
      %s30 = sshll.u32 %s1, 4
      %s31 = int_to_ptr.hbm [resolvable:$true] %s30
      %s32 = sshll.u32 [#allocation5], 4
      %s33 = int_to_ptr.vmem [resolvable:$true] %s32
      %38 = dma.hbm_to_vmem [thread:$0]  %s31, 2048, %s33, [#allocation6], 128, 128, 8
    $region9: #{tpu_custom_call.1} parent=1 // pred_fallthru
      _
    // Predicated region
    $region10: #{tpu_custom_call.1} parent=1 // pred_check
      _
    $region11: #{tpu_custom_call.1} parent=1 // pred_check_branch
      %40 = sbr.rel (0) target = $region13
    $region12: #{tpu_custom_call.1} parent=1 // pred_region
      _
    $region13: #{tpu_custom_call.1} parent=1 // pred_fallthru
      _
    // Predicated region
    $region14: #{tpu_custom_call.1} parent=1 // pred_check
      _
    $region15: #{tpu_custom_call.1} parent=1 // pred_check_branch
      %42 = sbr.rel (0) target = $region17
    $region16: #{tpu_custom_call.1} parent=1 // pred_region
      %44 = vsyncadd [#allocation6], 0
      %s45 = sshll.u32 %s3, 4
      %s46 = int_to_ptr.hbm [resolvable:$true] %s45
      %s47 = sshll.u32 [#allocation7], 4
      %s48 = int_to_ptr.vmem [resolvable:$true] %s47
      %53 = dma.hbm_to_vmem [thread:$0]  %s46, 2048, %s48, [#allocation6], 128, 128, 8
    $region17: #{tpu_custom_call.1} parent=1 // pred_fallthru
      _
    // Predicated region
    $region18: #{tpu_custom_call.1} parent=1 // pred_check
      _
    $region19: #{tpu_custom_call.1} parent=1 // pred_check_branch
      %55 = sbr.rel (0) target = $region21
    $region20: #{tpu_custom_call.1} parent=1 // pred_region
      _
    $region21: #{tpu_custom_call.1} parent=1 // pred_fallthru
      _
    // Predicated region
    $region22: #{tpu_custom_call.1} parent=1 // pred_check
      _
    $region23: #{tpu_custom_call.1} parent=1 // pred_check_branch
      %57 = sbr.rel (0) target = $region25
    $region24: #{tpu_custom_call.1} parent=1 // pred_region
      %59 = dma.done [#allocation3], 256
    $region25: #{tpu_custom_call.1} parent=1 // pred_fallthru
      _
    // Predicated region
    $region26: #{tpu_custom_call.1} parent=1 // pred_check
      _
    $region27: #{tpu_custom_call.1} parent=1 // pred_check_branch
      %61 = sbr.rel (0) target = $region29
    $region28: #{tpu_custom_call.1} parent=1 // pred_region
      %63 = dma.done [#allocation6], 2048
    $region29: #{tpu_custom_call.1} parent=1 // pred_fallthru
      _
    // Predicated region
    $region30: #{tpu_custom_call.1} parent=1 // pred_check
      _
    $region31: #{tpu_custom_call.1} parent=1 // pred_check_branch
      %65 = sbr.rel (0) target = $region33
    $region32: #{tpu_custom_call.1} parent=1 // pred_region
      %67 = dma.done [#allocation6], 2048
    $region33: #{tpu_custom_call.1} parent=1 // pred_fallthru
      _
    %v68 = vld [vmem:[#allocation2] sm:$0xff]
    %v69 = vld [vmem:[#allocation2 + $0x8] sm:$0xff]
    %v70 = vld [vmem:[#allocation5] sm:$0xff]
    %v71 = vld [vmem:[#allocation5 + $0x8] sm:$0xff]
    %v72 = vld [vmem:[#allocation5 + $0x10] sm:$0xff]
    %v73 = vld [vmem:[#allocation5 + $0x18] sm:$0xff]
    %v74 = vld [vmem:[#allocation5 + $0x20] sm:$0xff]
    %v75 = vld [vmem:[#allocation5 + $0x28] sm:$0xff]
    %v76 = vld [vmem:[#allocation5 + $0x30] sm:$0xff]
    %v77 = vld [vmem:[#allocation5 + $0x38] sm:$0xff]
    %v78 = vld [vmem:[#allocation5 + $0x40] sm:$0xff]
    %v79 = vld [vmem:[#allocation5 + $0x48] sm:$0xff]
    %v80 = vld [vmem:[#allocation5 + $0x50] sm:$0xff]
    %v81 = vld [vmem:[#allocation5 + $0x58] sm:$0xff]
    %v82 = vld [vmem:[#allocation5 + $0x60] sm:$0xff]
    %v83 = vld [vmem:[#allocation5 + $0x68] sm:$0xff]
    %v84 = vld [vmem:[#allocation5 + $0x70] sm:$0xff]
    %v85 = vld [vmem:[#allocation5 + $0x78] sm:$0xff]
    %v86 = vld [vmem:[%s2] sm:$0x1]
    %v88 = vperm.slane %v86, 0
    %90 = vmatpush.msra.mxu0 %v85
    %91 = vmatpush.msra.mxu0 %v84
    %92 = vmatpush.msra.mxu0 %v83
    %93 = vmatpush.msra.mxu0 %v82
    %94 = vmatpush.msra.mxu0 %v81
    %95 = vmatpush.msra.mxu0 %v80
    %96 = vmatpush.msra.mxu0 %v79
    %97 = vmatpush.msra.mxu0 %v78
    %98 = vmatpush.msra.mxu0 %v77
    %99 = vmatpush.msra.mxu0 %v76
    %100 = vmatpush.msra.mxu0 %v75
    %101 = vmatpush.msra.mxu0 %v74
    %102 = vmatpush.msra.mxu0 %v73
    %103 = vmatpush.msra.mxu0 %v72
    %104 = vmatpush.msra.mxu0 %v71
    %105 = vmatpush.msra.mxu0 %v70
    %106 = vmatmul.f32.gmra.mxu0 %v68
    %v107 = vpop.f32.mrf.mxu0
    %v108 = vadd.f32 %v88, %v107
    %109 = vmatmul.f32.gmra.mxu0 %v69
    %v110 = vpop.f32.mrf.mxu0
    %v111 = vadd.f32 %v88, %v110
    %112 = vdwg.mxu0
    %v113 = vxor.u32 %v108, 2147483648
    %v114 = vxor.u32 %v111, 2147483648
    %v115 = vmul.f32 %v113, 1.442695
    %v116 = vpow.pop %v115
    %v117 = vmul.f32 %v114, 1.442695
    %v118 = vpow.pop %v117
    %v119 = vadd.f32 %v116, 1.0
    %v120 = vadd.f32 %v118, 1.0
    %v121 = vrcp.pop %v119
    %v122 = vmul.f32 %v119, %v121
    %v123 = vsub.f32 1.0, %v122
    %v124 = vmul.f32 %v121, %v123
    %v125 = vadd.f32 %v121, %v124
    %vm126 = vweird.f32 %v119
    %vm127 = vweird.f32 %v121
    %vm128 = vmor %vm126, %vm127
    %v129 = vsel %vm128, %v121, %v125
    %v130 = vand.u32 2147483647, %v119
    %vm131 = vcmp.eq.f32.partialorder %v130, 8.507059e+37
    %v132 = vand.u32 %v119, 2147483648
    %v133 = vor.u32 1.1754944e-38, %v132
    %v134 = vsel %vm131, %v133, %v129
    %v135 = vmul.f32 1.0, %v134
    %v136 = vrcp.pop %v120
    %v137 = vmul.f32 %v120, %v136
    %v138 = vsub.f32 1.0, %v137
    %v139 = vmul.f32 %v136, %v138
    %v140 = vadd.f32 %v136, %v139
    %vm141 = vweird.f32 %v120
    %vm142 = vweird.f32 %v136
    %vm143 = vmor %vm141, %vm142
    %v144 = vsel %vm143, %v136, %v140
    %v145 = vand.u32 2147483647, %v120
    %vm146 = vcmp.eq.f32.partialorder %v145, 8.507059e+37
    %v147 = vand.u32 %v120, 2147483648
    %v148 = vor.u32 1.1754944e-38, %v147
    %v149 = vsel %vm146, %v148, %v144
    %v150 = vmul.f32 1.0, %v149
    %v151 = vmul.f32 %v108, %v135
    %v152 = vmul.f32 %v111, %v150
    %v153 = vld [vmem:[#allocation7] sm:$0xff]
    %v154 = vld [vmem:[#allocation7 + $0x8] sm:$0xff]
    %v155 = vld [vmem:[#allocation7 + $0x10] sm:$0xff]
    %v156 = vld [vmem:[#allocation7 + $0x18] sm:$0xff]
    %v157 = vld [vmem:[#allocation7 + $0x20] sm:$0xff]
    %v158 = vld [vmem:[#allocation7 + $0x28] sm:$0xff]
    %v159 = vld [vmem:[#allocation7 + $0x30] sm:$0xff]
    %v160 = vld [vmem:[#allocation7 + $0x38] sm:$0xff]
    %v161 = vld [vmem:[#allocation7 + $0x40] sm:$0xff]
    %v162 = vld [vmem:[#allocation7 + $0x48] sm:$0xff]
    %v163 = vld [vmem:[#allocation7 + $0x50] sm:$0xff]
    %v164 = vld [vmem:[#allocation7 + $0x58] sm:$0xff]
    %v165 = vld [vmem:[#allocation7 + $0x60] sm:$0xff]
    %v166 = vld [vmem:[#allocation7 + $0x68] sm:$0xff]
    %v167 = vld [vmem:[#allocation7 + $0x70] sm:$0xff]
    %v168 = vld [vmem:[#allocation7 + $0x78] sm:$0xff]
    %v169 = vld [vmem:[%s4] sm:$0x1]
    %v171 = vperm.slane %v169, 0
    %173 = vmatpush.msra.mxu0 %v168
    %174 = vmatpush.msra.mxu0 %v167
    %175 = vmatpush.msra.mxu0 %v166
    %176 = vmatpush.msra.mxu0 %v165
    %177 = vmatpush.msra.mxu0 %v164
    %178 = vmatpush.msra.mxu0 %v163
    %179 = vmatpush.msra.mxu0 %v162
    %180 = vmatpush.msra.mxu0 %v161
    %181 = vmatpush.msra.mxu0 %v160
    %182 = vmatpush.msra.mxu0 %v159
    %183 = vmatpush.msra.mxu0 %v158
    %184 = vmatpush.msra.mxu0 %v157
    %185 = vmatpush.msra.mxu0 %v156
    %186 = vmatpush.msra.mxu0 %v155
    %187 = vmatpush.msra.mxu0 %v154
    %188 = vmatpush.msra.mxu0 %v153
    %189 = vmatmul.f32.gmra.mxu0 %v151
    %v190 = vpop.f32.mrf.mxu0
    %v191 = vadd.f32 %v171, %v190
    %192 = vmatmul.f32.gmra.mxu0 %v152
    %v193 = vpop.f32.mrf.mxu0
    %v194 = vadd.f32 %v171, %v193
    %195 = vdwg.mxu0
    %196 = vst [vmem:[#allocation8] sm:$0xff] %v191
    %197 = vst [vmem:[#allocation8 + $0x8] sm:$0xff] %v194
    // Predicated region
    $region34: #{tpu_custom_call.1} parent=1 // pred_check
      _
    $region35: #{tpu_custom_call.1} parent=1 // pred_check_branch
      %199 = sbr.rel (0) target = $region37
    $region36: #{tpu_custom_call.1} parent=1 // pred_region
      %201 = vsyncadd [#allocation4], 0
      %s202 = sshll.u32 [#allocation8], 4
      %s203 = int_to_ptr.vmem [resolvable:$true] %s202
      %s204 = sshll.u32 %s5, 4
      %s205 = int_to_ptr.hbm [resolvable:$true] %s204
      %210 = dma.vmem_to_hbm [thread:$0]  %s203, 256, %s205, [#allocation4], 128, 128, 8
    $region37: #{tpu_custom_call.1} parent=1 // pred_fallthru
      _
    // Predicated region
    $region38: #{tpu_custom_call.1} parent=1 // pred_check
      _
    $region39: #{tpu_custom_call.1} parent=1 // pred_check_branch
      %212 = sbr.rel (0) target = $region41
    $region40: #{tpu_custom_call.1} parent=1 // pred_region
      %214 = dma.done [#allocation4], 256
    $region41: #{tpu_custom_call.1} parent=1 // pred_fallthru
      _
    %215 = vsyncpa [#allocation3], 1
    %216 = vsyncpa [#allocation6], 1
    %217 = vsyncpa [#allocation4], 1

</llo_original>
